<compile_context>
chip_gen: v6e
topology: v6e:2x2x1
jax: 0.10.0
libtpu: 0.0.40
codegen_flags: <defaults>
</compile_context>

<pallas_src>
import jax
import jax.numpy as jnp
from jax.experimental import pallas as pl
from jax.experimental.pallas import tpu as pltpu


_SMALL_COPY_BYTES = 1 << 20          # below this, skip the Pallas kernel
_TARGET_CHUNKS = 8                   # max concurrent DMAs per tensor
_MIN_CHUNK_BYTES = 512 * 1024        # don't split below ~512 KiB per DMA


def _nbytes(x):
    return x.size * jnp.dtype(x.dtype).itemsize


def _num_chunks(leading_dim, nbytes):
    """Largest divisor of leading_dim <= min(target, size-derived cap)."""
    max_by_size = max(1, nbytes // _MIN_CHUNK_BYTES)
    want = int(min(_TARGET_CHUNKS, max_by_size, max(1, leading_dim)))
    for c in range(want, 0, -1):
        if leading_dim % c == 0:
            return c
    return 1


def _make_identity_dma_kernel(img_chunks, msk_chunks, img_rows, msk_rows):
    """Build a grid-less kernel issuing (img_chunks + msk_chunks) concurrent
    HBM->HBM DMAs, then waiting on all of them."""
    img_rows_per = img_rows // img_chunks
    msk_rows_per = msk_rows // msk_chunks

    def kernel(img_hbm, msk_hbm, img_out, msk_out, sem):
        copies = []
        # Image chunks (static slices along the leading dim -> zero-cost views).
        for c in range(img_chunks):
            lo = c * img_rows_per
            cp = pltpu.make_async_copy(
                img_hbm.at[pl.ds(lo, img_rows_per)],
                img_out.at[pl.ds(lo, img_rows_per)],
                sem.at[c],
            )
            cp.start()
            copies.append(cp)
        # Mask chunks.
        for c in range(msk_chunks):
            lo = c * msk_rows_per
            cp = pltpu.make_async_copy(
                msk_hbm.at[pl.ds(lo, msk_rows_per)],
                msk_out.at[pl.ds(lo, msk_rows_per)],
                sem.at[img_chunks + c],
            )
            cp.start()
            copies.append(cp)
        # All DMAs are in flight; drain them.
        for cp in copies:
            cp.wait()

    return kernel


def _identity_copy_pallas(image, mask):
    """Materialize fresh copies of (image, mask) via concurrent HBM->HBM DMAs."""
    img_bytes = _nbytes(image)
    msk_bytes = _nbytes(mask)
    img_chunks = _num_chunks(image.shape[0] if image.ndim else 1, img_bytes)
    msk_chunks = _num_chunks(mask.shape[0] if mask.ndim else 1, msk_bytes)

    kernel = _make_identity_dma_kernel(
        img_chunks, msk_chunks,
        image.shape[0] if image.ndim else 1,
        mask.shape[0] if mask.ndim else 1,
    )

    return pl.pallas_call(
        kernel,
        out_shape=(
            jax.ShapeDtypeStruct(image.shape, image.dtype),
            jax.ShapeDtypeStruct(mask.shape, mask.dtype),
        ),
        # Leave everything in place (HBM for tensors of this size); the kernel
        # drives the DMAs itself.  No grid, no VMEM tiles, no pipeline steps.
        in_specs=[
            pl.BlockSpec(memory_space=pl.ANY),
            pl.BlockSpec(memory_space=pl.ANY),
        ],
        out_specs=(
            pl.BlockSpec(memory_space=pl.ANY),
            pl.BlockSpec(memory_space=pl.ANY),
        ),
        scratch_shapes=[pltpu.SemaphoreType.DMA((img_chunks + msk_chunks,))],
        # Accurate traffic hint so XLA can overlap this copy with neighbors.
        cost_estimate=pl.CostEstimate(
            flops=0,
            transcendentals=0,
            bytes_accessed=2 * (img_bytes + msk_bytes),
        ),
    )(image, mask)


def identity_forward(image, mask, *args, materialize=False, **kwargs):
    """Identity.forward(image, mask) -> (image, mask).

    Default: zero-copy (outputs alias the inputs, exactly like the PyTorch
    module which returns the same tensors).  materialize=True returns fresh
    buffers: tiny tensors use a plain XLA copy (kernel launch overhead would
    dominate), large tensors use the chunked HBM->HBM DMA Pallas kernel.
    """
    if not materialize:
        return image, mask
    total_bytes = _nbytes(image) + _nbytes(mask)
    if total_bytes < _SMALL_COPY_BYTES:
        # Size gate: plain XLA copies; no custom-call launch overhead.
        return jnp.copy(image), jnp.copy(mask)
    return _identity_copy_pallas(image, mask)


if __name__ == "__main__":
    key = jax.random.PRNGKey(0)
    k_img, k_mask = jax.random.split(key)

    # Small NCHW shapes consistent with the watermarking noise-layer usage.
    image = jax.random.normal(k_img, (2, 4, 16, 16), dtype=jnp.float32)
    mask = (jax.random.uniform(k_mask, (2, 4, 16, 16)) > 0.5).astype(jnp.float32)

    # 1) Default zero-copy path (true Identity semantics, zero data movement).
    out_image, out_mask = identity_forward(image, mask)
    jax.block_until_ready((out_image, out_mask))
    assert out_image.shape == image.shape and out_image.dtype == image.dtype
    assert out_mask.shape == mask.shape and out_mask.dtype == mask.dtype
    assert bool(jnp.all(out_image == image))
    assert bool(jnp.all(out_mask == mask))

    # 2) materialize=True on tiny tensors -> size gate -> plain XLA copy.
    cp_image, cp_mask = identity_forward(image, mask, materialize=True)
    jax.block_until_ready((cp_image, cp_mask))
    assert cp_image.shape == image.shape and cp_image.dtype == image.dtype
    assert cp_mask.shape == mask.shape and cp_mask.dtype == mask.dtype
    assert bool(jnp.all(cp_image == image))
    assert bool(jnp.all(cp_mask == mask))

    # 3) Pallas chunked-DMA path exercised explicitly once for coverage
    #    (real use hits it only above the ~1 MiB gate).
    pk_image, pk_mask = _identity_copy_pallas(image, mask)
    jax.block_until_ready((pk_image, pk_mask))
    assert pk_image.shape == image.shape and pk_image.dtype == image.dtype
    assert pk_mask.shape == mask.shape and pk_mask.dtype == mask.dtype
    assert bool(jnp.all(pk_image == image))
    assert bool(jnp.all(pk_mask == mask))

    print("KERNEL_OK")
</pallas_src>

<mosaic_0001>
module attributes {stable_mosaic.version = 11 : i64} {
  func.func @kernel(%arg0: memref<2x4x16x16xf32, #tpu.memory_space<any>>, %arg1: memref<2x4x16x16xf32, #tpu.memory_space<any>>, %arg2: memref<2x4x16x16xf32, #tpu.memory_space<any>>, %arg3: memref<2x4x16x16xf32, #tpu.memory_space<any>>, %arg4: memref<2x!tpu.dma_semaphore, #tpu.memory_space<semaphore_mem>>) attributes {dimension_semantics = [], scalar_prefetch = 0 : i64, scratch_operands = 1 : i64, tpu.core_type = #tpu.core_type<tc>} {
    %c0_i32 = arith.constant 0 : i32
    %c0_i32_0 = arith.constant 0 : i32
    %c0_i32_1 = arith.constant 0 : i32
    %c0_i32_2 = arith.constant 0 : i32
    %c0_i32_3 = arith.constant 0 : i32
    %0 = tpu.memref_slice %arg0[%c0_i32_0, %c0_i32_1, %c0_i32_2, %c0_i32_3] : memref<2x4x16x16xf32, #tpu.memory_space<any>> -> memref<2x4x16x16xf32, #tpu.memory_space<any>>
    %c0_i32_4 = arith.constant 0 : i32
    %c0_i32_5 = arith.constant 0 : i32
    %c0_i32_6 = arith.constant 0 : i32
    %c0_i32_7 = arith.constant 0 : i32
    %1 = tpu.memref_slice %arg2[%c0_i32_4, %c0_i32_5, %c0_i32_6, %c0_i32_7] : memref<2x4x16x16xf32, #tpu.memory_space<any>> -> memref<2x4x16x16xf32, #tpu.memory_space<any>>
    %2 = tpu.memref_slice %arg4[%c0_i32] : memref<2x!tpu.dma_semaphore, #tpu.memory_space<semaphore_mem>> -> memref<1x!tpu.dma_semaphore, #tpu.memory_space<semaphore_mem>>
    %3 = tpu.memref_squeeze %2 : memref<1x!tpu.dma_semaphore, #tpu.memory_space<semaphore_mem>> -> memref<!tpu.dma_semaphore, #tpu.memory_space<semaphore_mem>>
    tpu.enqueue_dma source(%0 : memref<2x4x16x16xf32, #tpu.memory_space<any>>) target(%1 : memref<2x4x16x16xf32, #tpu.memory_space<any>>) target_semaphore(%3 : memref<!tpu.dma_semaphore, #tpu.memory_space<semaphore_mem>>)
    %c1_i32 = arith.constant 1 : i32
    %c0_i32_8 = arith.constant 0 : i32
    %c0_i32_9 = arith.constant 0 : i32
    %c0_i32_10 = arith.constant 0 : i32
    %c0_i32_11 = arith.constant 0 : i32
    %4 = tpu.memref_slice %arg1[%c0_i32_8, %c0_i32_9, %c0_i32_10, %c0_i32_11] : memref<2x4x16x16xf32, #tpu.memory_space<any>> -> memref<2x4x16x16xf32, #tpu.memory_space<any>>
    %c0_i32_12 = arith.constant 0 : i32
    %c0_i32_13 = arith.constant 0 : i32
    %c0_i32_14 = arith.constant 0 : i32
    %c0_i32_15 = arith.constant 0 : i32
    %5 = tpu.memref_slice %arg3[%c0_i32_12, %c0_i32_13, %c0_i32_14, %c0_i32_15] : memref<2x4x16x16xf32, #tpu.memory_space<any>> -> memref<2x4x16x16xf32, #tpu.memory_space<any>>
    %6 = tpu.memref_slice %arg4[%c1_i32] : memref<2x!tpu.dma_semaphore, #tpu.memory_space<semaphore_mem>> -> memref<1x!tpu.dma_semaphore, #tpu.memory_space<semaphore_mem>>
    %7 = tpu.memref_squeeze %6 : memref<1x!tpu.dma_semaphore, #tpu.memory_space<semaphore_mem>> -> memref<!tpu.dma_semaphore, #tpu.memory_space<semaphore_mem>>
    tpu.enqueue_dma source(%4 : memref<2x4x16x16xf32, #tpu.memory_space<any>>) target(%5 : memref<2x4x16x16xf32, #tpu.memory_space<any>>) target_semaphore(%7 : memref<!tpu.dma_semaphore, #tpu.memory_space<semaphore_mem>>)
    %c0_i32_16 = arith.constant 0 : i32
    %c0_i32_17 = arith.constant 0 : i32
    %c0_i32_18 = arith.constant 0 : i32
    %c0_i32_19 = arith.constant 0 : i32
    %c0_i32_20 = arith.constant 0 : i32
    %8 = tpu.memref_slice %arg0[%c0_i32_17, %c0_i32_18, %c0_i32_19, %c0_i32_20] : memref<2x4x16x16xf32, #tpu.memory_space<any>> -> memref<2x4x16x16xf32, #tpu.memory_space<any>>
    %c0_i32_21 = arith.constant 0 : i32
    %c0_i32_22 = arith.constant 0 : i32
    %c0_i32_23 = arith.constant 0 : i32
    %c0_i32_24 = arith.constant 0 : i32
    %9 = tpu.memref_slice %arg2[%c0_i32_21, %c0_i32_22, %c0_i32_23, %c0_i32_24] : memref<2x4x16x16xf32, #tpu.memory_space<any>> -> memref<2x4x16x16xf32, #tpu.memory_space<any>>
    %10 = tpu.memref_slice %arg4[%c0_i32_16] : memref<2x!tpu.dma_semaphore, #tpu.memory_space<semaphore_mem>> -> memref<1x!tpu.dma_semaphore, #tpu.memory_space<semaphore_mem>>
    %11 = tpu.memref_squeeze %10 : memref<1x!tpu.dma_semaphore, #tpu.memory_space<semaphore_mem>> -> memref<!tpu.dma_semaphore, #tpu.memory_space<semaphore_mem>>
    tpu.wait_dma2 semaphore(%11 : memref<!tpu.dma_semaphore, #tpu.memory_space<semaphore_mem>>) src(%8 : memref<2x4x16x16xf32, #tpu.memory_space<any>>) dst(%9 : memref<2x4x16x16xf32, #tpu.memory_space<any>>)
    %c1_i32_25 = arith.constant 1 : i32
    %c0_i32_26 = arith.constant 0 : i32
    %c0_i32_27 = arith.constant 0 : i32
    %c0_i32_28 = arith.constant 0 : i32
    %c0_i32_29 = arith.constant 0 : i32
    %12 = tpu.memref_slice %arg1[%c0_i32_26, %c0_i32_27, %c0_i32_28, %c0_i32_29] : memref<2x4x16x16xf32, #tpu.memory_space<any>> -> memref<2x4x16x16xf32, #tpu.memory_space<any>>
    %c0_i32_30 = arith.constant 0 : i32
    %c0_i32_31 = arith.constant 0 : i32
    %c0_i32_32 = arith.constant 0 : i32
    %c0_i32_33 = arith.constant 0 : i32
    %13 = tpu.memref_slice %arg3[%c0_i32_30, %c0_i32_31, %c0_i32_32, %c0_i32_33] : memref<2x4x16x16xf32, #tpu.memory_space<any>> -> memref<2x4x16x16xf32, #tpu.memory_space<any>>
    %14 = tpu.memref_slice %arg4[%c1_i32_25] : memref<2x!tpu.dma_semaphore, #tpu.memory_space<semaphore_mem>> -> memref<1x!tpu.dma_semaphore, #tpu.memory_space<semaphore_mem>>
    %15 = tpu.memref_squeeze %14 : memref<1x!tpu.dma_semaphore, #tpu.memory_space<semaphore_mem>> -> memref<!tpu.dma_semaphore, #tpu.memory_space<semaphore_mem>>
    tpu.wait_dma2 semaphore(%15 : memref<!tpu.dma_semaphore, #tpu.memory_space<semaphore_mem>>) src(%12 : memref<2x4x16x16xf32, #tpu.memory_space<any>>) dst(%13 : memref<2x4x16x16xf32, #tpu.memory_space<any>>)
    return
  }
}

</mosaic_0001>

<llo_original>
// kernel: tpu_custom_call.1
$region0: #{tpu_custom_call.1}
  #allocation0 [shape = 'u32[]', space=smem, size = 0x4, offset = 0x4, fixed_abs, tag = 'smem constant byte address 0x4 - core index']
  #allocation1 [shape = 'u32[144,128]{1,0:T(1,128)}', space=vmem, size = 0x12000, scoped, tag = 'internal scratch']
  #allocation2 [shape = 's32[2]{0}', space=sflag, size = 0x8, scoped, tag = 'scratch operand']
  #allocation3 [shape = 's32[]', space=sflag, size = 0x4, offset = 0, fixed_abs, tag = 'sflag constant byte address 0x0 - dummy sync flag']
  #allocation4 [shape = 'u32[0]{0}', space=smem, size = 0, offset = 0, fixed_abs, tag = 'smem constant byte address 0x0 - null']
  #allocation5 [shape = 's32[]', space=sflag, size = 0x4, offset = 0, fixed_abs, tag = 'sflag constant byte address 0x0 - dummy sync flag']
  #allocation6 [shape = 'u32[0]{0}', space=smem, size = 0, offset = 0, fixed_abs, tag = 'smem constant byte address 0x0 - null']
  %s0 = inlined_call_operand.hbm [shape: f32[2,4,16,16], index: 0, kind: input, shape index: {}]
  %s1 = inlined_call_operand.hbm [shape: f32[2,4,16,16], index: 1, kind: input, shape index: {}]
  %s2 = inlined_call_operand.hbm [shape: f32[2,4,16,16], index: 2, kind: output, shape index: {0}]
  %s3 = inlined_call_operand.hbm [shape: f32[2,4,16,16], index: 3, kind: output, shape index: {1}]
  %4 = xla_tuple %s2, %s3
  %s5 = sld [smem:[#allocation0]]
  $region2: #{tpu_custom_call.1} parent=0
    _
  %s7 = ssub.s32 1, %s5
  %s8 = scalar_select 0, %s7, %s5
  %s10 = sshll.u32 1, 14
  %s11 = sxor.u32 4294967295, %s10
  %15 = dma.general %s0, 2048, %s2, [#allocation2], 131072, [#allocation4], 0, 0
  %s16 = scalar_lea.sflag [#allocation2], 1
  %s18 = sshll.u32 1, 14
  %s19 = sxor.u32 4294967295, %s18
  %23 = dma.general %s1, 2048, %s3, %s16, 131072, [#allocation6], 0, 0
  %s24 = smul.u32 2, 4
  %s25 = smul.u32 %s24, 16
  %s26 = smul.u32 %s25, 1
  %s27 = sshll.u32 %s26, 4
  %28 = dma.done [#allocation2], %s27
  %s29 = sshll.u32 %s26, 4
  %30 = dma.done %s16, %s29
  %31 = vsyncmov [#allocation2]
  %s32 = vpop.sfrf %31
  %p33 = scmp.eq.s32.totalorder %s32, 0
  %p34 = pneg %p33
  %36 = shalt.err (%p34)
  %s37 = scalar_lea.sflag [#allocation2], 1
  %38 = vsyncmov %s37
  %s39 = vpop.sfrf %38
  %p40 = scmp.eq.s32.totalorder %s39, 0
  %p41 = pneg %p40
  %43 = shalt.err (%p41)

</llo_original>
